<compile_context>
chip_gen: v5e
topology: v5e:2x2
jax: 0.10.0
libtpu: 0.0.40
codegen_flags: <defaults>
</compile_context>

<pallas_src>
import functools
import math

import jax
import jax.numpy as jnp
from jax.experimental import pallas as pl
from jax.experimental.pallas import tpu as pltpu


# ----------------------------- tiling helpers --------------------------------

_ROW_TILES = (512, 256, 128, 64, 32, 16, 8)
_COL_TILES = (1024, 896, 768, 640, 512, 384, 256, 128)
_VMEM_BUDGET = 40 * 1024 * 1024       # keep blocks under this (v7x: 64 MiB phys)
_VMEM_LIMIT = 48 * 1024 * 1024        # explicit scoped-VMEM request


def _mm_vmem(tm, tn, K, extra_row_blocks=0, out_bytes=2):
    """Rough double-buffered VMEM footprint of a whole-K matmul block."""
    x_blk = tm * K * 2
    w_blk = K * tn * 2
    o_blk = tm * tn * out_bytes
    r_blk = extra_row_blocks * tm * tn * 2
    b_blk = 4 * tn
    return 2 * (x_blk + w_blk + o_blk + r_blk + b_blk)


def _choose_tiles(M, N, K, *, extra_row_blocks=0, out_bytes=2, force_tn=None):
    """Pick (tm, tn) with whole-K blocks under the VMEM budget."""
    tn_probe = force_tn if force_tn is not None else min(N, 512)
    tm = None
    for t in _ROW_TILES:
        if M % t == 0 and _mm_vmem(t, tn_probe, K, extra_row_blocks,
                                   out_bytes) <= _VMEM_BUDGET:
            tm = t
            break
    if tm is None:
        tm = M                      # tiny/awkward M: full extent (always legal)
    if force_tn is not None:
        return tm, force_tn
    if _mm_vmem(tm, N, K, extra_row_blocks, out_bytes) <= _VMEM_BUDGET:
        return tm, N                # whole-N block preferred
    for t in _COL_TILES:
        if N % t == 0 and _mm_vmem(tm, t, K, extra_row_blocks,
                                   out_bytes) <= _VMEM_BUDGET:
            return tm, t
    return tm, N


def _pick_head_group(n_heads, d_head):
    """Heads per attention block: G*dH a multiple of 128 (lane-dense), <=256."""
    for cap in (256, 4096):
        best = None
        for g in range(1, n_heads + 1):
            if n_heads % g == 0 and (g * d_head) % 128 == 0 and g * d_head <= cap:
                best = g
        if best is not None:
            return best
    raise ValueError("n_heads*d_head must allow a 128-multiple head group")


# ----------------------------- kernel helpers --------------------------------

_SQRT_2_OVER_PI = 0.7978845608028654


def _gelu_tanh(x):
    # tanh-approx GELU: tanh lowers to the (otherwise idle) EUP slot instead of
    # ~13 f32 VALU ops/element for a polynomial erf.  <~1e-3 off exact erf GELU.
    return 0.5 * x * (1.0 + jnp.tanh(_SQRT_2_OVER_PI * (x + 0.044715 * x * x * x)))


def _layernorm(y, g, b, eps=1e-12):
    mean = jnp.mean(y, axis=-1, keepdims=True)
    var = jnp.mean(jnp.square(y - mean), axis=-1, keepdims=True)
    inv = jax.lax.rsqrt(var + eps)
    return (y - mean) * inv * g + b


# ----------------------------- Pallas kernels --------------------------------

def _mm_bias_kernel(x_ref, w_ref, b_ref, o_ref, *, gelu):
    # Whole-K matmul block: grid (M/tm, N/tn), no k axis, no acc scratch.
    y = jnp.dot(x_ref[...], w_ref[...], preferred_element_type=jnp.float32)
    y = y + b_ref[...]
    if gelu:
        y = _gelu_tanh(y)
    o_ref[...] = y.astype(o_ref.dtype)


def _mm_nobias_kernel(x_ref, w_ref, o_ref):
    o_ref[...] = jnp.dot(x_ref[...], w_ref[...],
                         preferred_element_type=jnp.float32).astype(o_ref.dtype)


def _mm_bias_res_ln_kernel(x_ref, w_ref, b_ref, r_ref, g_ref, be_ref, o_ref):
    # Whole-K, whole-N (=hidden) block so LayerNorm can fuse; grid (M/tm,).
    y = jnp.dot(x_ref[...], w_ref[...], preferred_element_type=jnp.float32)
    y = y + b_ref[...] + r_ref[...].astype(jnp.float32)
    o_ref[...] = _layernorm(y, g_ref[...], be_ref[...]).astype(o_ref.dtype)


def _embed_ln_kernel(w_ref, p_ref, t_ref, g_ref, be_ref, o_ref):
    # Fused (word + position + token_type) add + LayerNorm, one batch per step.
    x = (w_ref[...].astype(jnp.float32)
         + p_ref[...].astype(jnp.float32)
         + t_ref[...].astype(jnp.float32))
    o_ref[...] = _layernorm(x, g_ref[...], be_ref[...]).astype(o_ref.dtype)


def _mha_kernel(q_ref, k_ref, v_ref, m_ref, o_ref, *, heads, d_head):
    # One (batch, head-group) block. q/k/v/o: [S, G*dH] bf16; m: [1, S] f32
    # additive mask.  1/sqrt(dH) is already folded into the Q projection.
    # TODO(synk): tile the query axis (flash-style) for S >= 2048 so the [S,S]
    #             score block stays within v7x VMEM.
    m = m_ref[...]
    for h in range(heads):
        lo = h * d_head
        q = q_ref[:, lo:lo + d_head]
        k = k_ref[:, lo:lo + d_head]
        v = v_ref[:, lo:lo + d_head]
        s = jax.lax.dot_general(q, k, (((1,), (1,)), ((), ())),
                                preferred_element_type=jnp.float32)     # [S, S]
        s = s + m
        mx = jnp.max(s, axis=-1, keepdims=True)
        p = jnp.exp(s - mx)
        p = p * pl.reciprocal(jnp.sum(p, axis=-1, keepdims=True), approx=True)
        o_ref[:, lo:lo + d_head] = jnp.dot(
            p.astype(v.dtype), v,
            preferred_element_type=jnp.float32).astype(o_ref.dtype)


# ----------------------------- wrappers ---------------------------------------

def matmul_bias(x, w, b, *, out_dtype=jnp.bfloat16, gelu=False):
    """(x @ w + b), optional fused tanh-GELU.  Whole-K blocks, grid (M/tm,N/tn)."""
    M, K = x.shape
    N = w.shape[1]
    ob = jnp.dtype(out_dtype).itemsize
    tm, tn = _choose_tiles(M, N, K, out_bytes=ob)
    cost = pl.CostEstimate(flops=2 * M * N * K,
                           transcendentals=M * N if gelu else 0,
                           bytes_accessed=(M * K + K * N) * 2 + M * N * ob)
    return pl.pallas_call(
        functools.partial(_mm_bias_kernel, gelu=gelu),
        grid=(M // tm, N // tn),
        in_specs=[pl.BlockSpec((tm, K), lambda i, j: (i, 0)),
                  pl.BlockSpec((K, tn), lambda i, j: (0, j)),
                  pl.BlockSpec((1, tn), lambda i, j: (0, j))],
        out_specs=pl.BlockSpec((tm, tn), lambda i, j: (i, j)),
        out_shape=jax.ShapeDtypeStruct((M, N), out_dtype),
        compiler_params=pltpu.CompilerParams(
            dimension_semantics=("parallel", "parallel"),
            vmem_limit_bytes=_VMEM_LIMIT),
        cost_estimate=cost,
    )(x, w, b)


def matmul_nobias(x, w, *, out_dtype=jnp.bfloat16):
    """Bias-free projection (nn.Linear(hidden, n_out, False)); lane-padded N."""
    M, K = x.shape
    N = w.shape[1]
    ob = jnp.dtype(out_dtype).itemsize
    tm, tn = _choose_tiles(M, N, K, out_bytes=ob)
    cost = pl.CostEstimate(flops=2 * M * N * K, transcendentals=0,
                           bytes_accessed=(M * K + K * N) * 2 + M * N * ob)
    return pl.pallas_call(
        _mm_nobias_kernel,
        grid=(M // tm, N // tn),
        in_specs=[pl.BlockSpec((tm, K), lambda i, j: (i, 0)),
                  pl.BlockSpec((K, tn), lambda i, j: (0, j))],
        out_specs=pl.BlockSpec((tm, tn), lambda i, j: (i, j)),
        out_shape=jax.ShapeDtypeStruct((M, N), out_dtype),
        compiler_params=pltpu.CompilerParams(
            dimension_semantics=("parallel", "parallel"),
            vmem_limit_bytes=_VMEM_LIMIT),
        cost_estimate=cost,
    )(x, w)


def matmul_bias_residual_ln(x, w, b, residual, gamma, beta,
                            *, out_dtype=jnp.bfloat16):
    """LayerNorm(x @ w + b + residual) with whole K and whole N (=hidden)."""
    M, K = x.shape
    N = w.shape[1]
    tm, _ = _choose_tiles(M, N, K, extra_row_blocks=1, out_bytes=2, force_tn=N)
    cost = pl.CostEstimate(flops=2 * M * N * K, transcendentals=0,
                           bytes_accessed=(M * K + K * N + 2 * M * N) * 2)
    return pl.pallas_call(
        _mm_bias_res_ln_kernel,
        grid=(M // tm,),
        in_specs=[pl.BlockSpec((tm, K), lambda i: (i, 0)),
                  pl.BlockSpec((K, N), lambda i: (0, 0)),
                  pl.BlockSpec((1, N), lambda i: (0, 0)),
                  pl.BlockSpec((tm, N), lambda i: (i, 0)),
                  pl.BlockSpec((1, N), lambda i: (0, 0)),
                  pl.BlockSpec((1, N), lambda i: (0, 0))],
        out_specs=pl.BlockSpec((tm, N), lambda i: (i, 0)),
        out_shape=jax.ShapeDtypeStruct((M, N), out_dtype),
        compiler_params=pltpu.CompilerParams(
            dimension_semantics=("parallel",),
            vmem_limit_bytes=_VMEM_LIMIT),
        cost_estimate=cost,
    )(x, w, b, residual, gamma, beta)


def embed_layernorm(wemb, pos, typ, gamma, beta, n_batches, seq_len,
                    *, out_dtype=jnp.bfloat16):
    """Fused (word + pos + type) add + LayerNorm; grid over batches."""
    M, H = wemb.shape
    return pl.pallas_call(
        _embed_ln_kernel,
        grid=(n_batches,),
        in_specs=[pl.BlockSpec((seq_len, H), lambda b: (b, 0)),
                  pl.BlockSpec((seq_len, H), lambda b: (0, 0)),
                  pl.BlockSpec((1, H), lambda b: (0, 0)),
                  pl.BlockSpec((1, H), lambda b: (0, 0)),
                  pl.BlockSpec((1, H), lambda b: (0, 0))],
        out_specs=pl.BlockSpec((seq_len, H), lambda b: (b, 0)),
        out_shape=jax.ShapeDtypeStruct((M, H), out_dtype),
        compiler_params=pltpu.CompilerParams(dimension_semantics=("parallel",)),
    )(wemb, pos, typ, gamma, beta)


def pallas_attention(qkv, amask, n_batches, seq_len, n_heads, d_head, hidden,
                     *, out_dtype=jnp.bfloat16):
    """Multi-head attention reading head-groups straight out of [M, 3H] QKV and
    writing the context straight into a lane-dense [M, H] output (no transposes).
    qkv: [M, 3H] bf16;  amask: [B, 1, S] f32 additive mask."""
    M = qkv.shape[0]
    G = _pick_head_group(n_heads, d_head)
    n_grp = n_heads // G
    ghd = G * d_head
    cost = pl.CostEstimate(
        flops=4 * n_batches * n_heads * seq_len * seq_len * d_head,
        transcendentals=n_batches * n_heads * seq_len * seq_len,
        bytes_accessed=4 * M * hidden * 2)
    # NOTE(v7x): with 2 TCs the (B, nH//G) parallel grid should have >=2 blocks.
    return pl.pallas_call(
        functools.partial(_mha_kernel, heads=G, d_head=d_head),
        grid=(n_batches, n_grp),
        in_specs=[
            pl.BlockSpec((seq_len, ghd), lambda b, g: (b, g)),               # Q cols
            pl.BlockSpec((seq_len, ghd), lambda b, g: (b, n_grp + g)),       # K cols
            pl.BlockSpec((seq_len, ghd), lambda b, g: (b, 2 * n_grp + g)),   # V cols
            pl.BlockSpec((None, 1, seq_len), lambda b, g: (b, 0, 0)),        # mask
        ],
        out_specs=pl.BlockSpec((seq_len, ghd), lambda b, g: (b, g)),
        out_shape=jax.ShapeDtypeStruct((M, hidden), out_dtype),
        compiler_params=pltpu.CompilerParams(
            dimension_semantics=("parallel", "parallel")),
        cost_estimate=cost,
    )(qkv, qkv, qkv, amask)


# ----------------------------- mini-BERT forward ------------------------------

def _encoder_layer(p, x2, amask, n_batches, seq_len):
    # x2: [M, H] bf16 ; amask: [B, 1, S] f32 additive
    H = x2.shape[1]
    # Fused QKV projection (1/sqrt(dH) pre-folded into Q weights) -> [M, 3H].
    qkv = matmul_bias(x2, p["w_qkv"], p["b_qkv"])
    ctx = pallas_attention(qkv, amask, n_batches, seq_len,
                           p["n_heads"], p["d_head"], H)            # [M, H]
    # Attention-output matmul with fused bias + residual + LayerNorm.
    x2 = matmul_bias_residual_ln(ctx, p["wo"], p["bo"], x2,
                                 p["ln1_g"], p["ln1_b"])
    # FFN: up-proj with fused tanh-GELU, down-proj with fused residual + LN.
    h = matmul_bias(x2, p["w1"], p["b1"], gelu=True)
    x2 = matmul_bias_residual_ln(h, p["w2"], p["b2"], x2,
                                 p["ln2_g"], p["ln2_b"])
    return x2


def bert_embedding_forward(params, subwords, bert_mask):
    """BertEmbedding.forward: BERT encoder -> last_hidden_state -> projection."""
    B, S = subwords.shape
    H = params["hidden"]
    assert S % 8 == 0, "sequence length must be a multiple of 8 (sublane tile)"

    # Pad with whole fake batches so the row count supports big row tiles
    # instead of falling off the tiny-tile performance cliff.
    M = B * S
    row_align = 256 if M >= 256 else 8
    B_pad = B
    while (B_pad * S) % row_align != 0:
        B_pad += 1
    if B_pad != B:
        pad = B_pad - B
        subwords = jnp.concatenate(
            [subwords, jnp.zeros((pad, S), subwords.dtype)], axis=0)
        bert_mask = jnp.concatenate(
            [bert_mask, jnp.ones((pad, S), bert_mask.dtype)], axis=0)
    M_pad = B_pad * S

    # Word-embedding gather in XLA; pos/type adds + LayerNorm fused in Pallas.
    # TODO(synk): fold the gather into the LN kernel via PrefetchScalarGridSpec
    #             + pl.Element row gather on the token ids.
    wemb = jnp.take(params["word_emb"], subwords.reshape(-1), axis=0)  # [M,H] bf16
    x2 = embed_layernorm(wemb, params["pos_emb"][:S], params["type_emb"][:1],
                         params["emb_ln_g"], params["emb_ln_b"], B_pad, S)

    # Additive attention mask precomputed once (not per grid step).
    amask = ((bert_mask.astype(jnp.float32) - 1.0) * 1e9).reshape(B_pad, 1, S)

    for layer in params["layers"]:
        x2 = _encoder_layer(layer, x2, amask, B_pad, S)

    # hidden_size != n_out -> bias-free projection, lane-padded to 128, f32 out.
    out = matmul_nobias(x2, params["proj_w_pad"], out_dtype=jnp.float32)
    n_out = params["n_out"]
    return out[:M, :n_out].reshape(B, S, n_out)


# ----------------------------- parameter init ---------------------------------

def init_params(key, vocab, hidden, n_layers, n_heads, intermediate, max_pos,
                n_out):
    d_head = hidden // n_heads
    keys = iter(jax.random.split(key, 8 + 8 * n_layers))

    def nrm(shape, dtype=jnp.bfloat16):
        return (jax.random.normal(next(keys), shape, jnp.float32) * 0.02
                ).astype(dtype)

    n_out_pad = ((n_out + 127) // 128) * 128
    proj = jnp.zeros((hidden, n_out_pad), jnp.float32)
    proj = proj.at[:, :n_out].set(
        jax.random.normal(next(keys), (hidden, n_out), jnp.float32) * 0.02)

    params = dict(
        hidden=hidden, n_out=n_out,
        word_emb=nrm((vocab, hidden)),
        pos_emb=nrm((max_pos, hidden)),
        type_emb=nrm((2, hidden)),
        emb_ln_g=jnp.ones((1, hidden), jnp.float32),
        emb_ln_b=jnp.zeros((1, hidden), jnp.float32),
        proj_w_pad=proj.astype(jnp.bfloat16),
        layers=[],
    )
    scale = 1.0 / math.sqrt(d_head)
    for _ in range(n_layers):
        wq = jax.random.normal(next(keys), (hidden, hidden), jnp.float32) * 0.02
        wk = jax.random.normal(next(keys), (hidden, hidden), jnp.float32) * 0.02
        wv = jax.random.normal(next(keys), (hidden, hidden), jnp.float32) * 0.02
        # Fold 1/sqrt(d_head) into the Q projection (no in-kernel scale/cast).
        w_qkv = jnp.concatenate([wq * scale, wk, wv], axis=1).astype(jnp.bfloat16)
        params["layers"].append(dict(
            n_heads=n_heads, d_head=d_head,
            w_qkv=w_qkv,
            b_qkv=jnp.zeros((1, 3 * hidden), jnp.float32),
            wo=nrm((hidden, hidden)),
            bo=jnp.zeros((1, hidden), jnp.float32),
            ln1_g=jnp.ones((1, hidden), jnp.float32),
            ln1_b=jnp.zeros((1, hidden), jnp.float32),
            w1=nrm((hidden, intermediate)),
            b1=jnp.zeros((1, intermediate), jnp.float32),
            w2=nrm((intermediate, hidden)),
            b2=jnp.zeros((1, hidden), jnp.float32),
            ln2_g=jnp.ones((1, hidden), jnp.float32),
            ln2_b=jnp.zeros((1, hidden), jnp.float32),
        ))
    return params


# ----------------------------- main --------------------------------------------

if __name__ == "__main__":
    B, S = 2, 8
    VOCAB, HIDDEN, N_LAYERS, N_HEADS, INTER, N_OUT = 100, 128, 2, 2, 512, 64

    key = jax.random.PRNGKey(0)
    pkey, dkey = jax.random.split(key)
    params = init_params(pkey, VOCAB, HIDDEN, N_LAYERS, N_HEADS, INTER, S, N_OUT)

    subwords = jax.random.randint(dkey, (B, S), 0, VOCAB, dtype=jnp.int32)
    bert_mask = jnp.array([[1, 1, 1, 1, 1, 1, 1, 1],
                           [1, 1, 1, 1, 1, 1, 0, 0]], dtype=jnp.int32)

    out = bert_embedding_forward(params, subwords, bert_mask)
    out = jax.block_until_ready(out)
    assert out.shape == (B, S, N_OUT) and out.dtype == jnp.float32
    print("KERNEL_OK")
</pallas_src>

<mosaic_0001>
module attributes {stable_mosaic.version = 11 : i64} {
  func.func @_embed_ln_kernel(%arg0: i32, %arg1: memref<8x128xbf16, #tpu.memory_space<vmem>>, %arg2: memref<8x128xbf16, #tpu.memory_space<vmem>>, %arg3: memref<1x128xbf16, #tpu.memory_space<vmem>>, %arg4: memref<1x128xf32, #tpu.memory_space<vmem>>, %arg5: memref<1x128xf32, #tpu.memory_space<vmem>>, %arg6: memref<8x128xbf16, #tpu.memory_space<vmem>>) attributes {dimension_semantics = [#tpu.dimension_semantics<parallel>], iteration_bounds = array<i64: 2>, scalar_prefetch = 0 : i64, scratch_operands = 0 : i64, tpu.core_type = #tpu.core_type<tc>, window_params = [{transform_indices = @transform_0, window_bounds = array<i64: 8, 128>}, {pipeline_mode = #tpu.pipeline_mode<synchronous>, transform_indices = @transform_1, window_bounds = array<i64: 8, 128>}, {pipeline_mode = #tpu.pipeline_mode<synchronous>, transform_indices = @transform_2, window_bounds = array<i64: 1, 128>}, {pipeline_mode = #tpu.pipeline_mode<synchronous>, transform_indices = @transform_3, window_bounds = array<i64: 1, 128>}, {pipeline_mode = #tpu.pipeline_mode<synchronous>, transform_indices = @transform_4, window_bounds = array<i64: 1, 128>}, {transform_indices = @transform_5, window_bounds = array<i64: 8, 128>}]} {
    %c0 = arith.constant 0 : index
    %c0_0 = arith.constant 0 : index
    %0 = vector.load %arg1[%c0, %c0_0] : memref<8x128xbf16, #tpu.memory_space<vmem>>, vector<8x128xbf16>
    %1 = arith.extf %0 : vector<8x128xbf16> to vector<8x128xf32>
    %c0_1 = arith.constant 0 : index
    %c0_2 = arith.constant 0 : index
    %2 = vector.load %arg2[%c0_1, %c0_2] : memref<8x128xbf16, #tpu.memory_space<vmem>>, vector<8x128xbf16>
    %3 = arith.extf %2 : vector<8x128xbf16> to vector<8x128xf32>
    %4 = arith.addf %1, %3 : vector<8x128xf32>
    %c0_3 = arith.constant 0 : index
    %c0_4 = arith.constant 0 : index
    %5 = vector.load %arg3[%c0_3, %c0_4] : memref<1x128xbf16, #tpu.memory_space<vmem>>, vector<1x128xbf16>
    %6 = arith.extf %5 : vector<1x128xbf16> to vector<1x128xf32>
    %7 = vector.broadcast %6 : vector<1x128xf32> to vector<8x128xf32>
    %8 = arith.addf %4, %7 : vector<8x128xf32>
    %c0_5 = arith.constant 0 : index
    %c0_6 = arith.constant 0 : index
    %9 = vector.load %arg4[%c0_5, %c0_6] : memref<1x128xf32, #tpu.memory_space<vmem>>, vector<1x128xf32>
    %c0_7 = arith.constant 0 : index
    %c0_8 = arith.constant 0 : index
    %10 = vector.load %arg5[%c0_7, %c0_8] : memref<1x128xf32, #tpu.memory_space<vmem>>, vector<1x128xf32>
    %cst = arith.constant dense<0.000000e+00> : vector<8xf32>
    %11 = vector.multi_reduction <add>, %8, %cst [1] : vector<8x128xf32> to vector<8xf32>
    %12 = vector.shape_cast %11 : vector<8xf32> to vector<8x1xf32>
    %cst_9 = arith.constant 1.280000e+02 : f32
    %13 = vector.broadcast %cst_9 : f32 to vector<8x1xf32>
    %14 = arith.divf %12, %13 : vector<8x1xf32>
    %15 = vector.broadcast %14 : vector<8x1xf32> to vector<8x128xf32>
    %16 = arith.subf %8, %15 : vector<8x128xf32>
    %17 = arith.mulf %16, %16 : vector<8x128xf32>
    %cst_10 = arith.constant dense<0.000000e+00> : vector<8xf32>
    %18 = vector.multi_reduction <add>, %17, %cst_10 [1] : vector<8x128xf32> to vector<8xf32>
    %19 = vector.shape_cast %18 : vector<8xf32> to vector<8x1xf32>
    %cst_11 = arith.constant 1.280000e+02 : f32
    %20 = vector.broadcast %cst_11 : f32 to vector<8x1xf32>
    %21 = arith.divf %19, %20 : vector<8x1xf32>
    %cst_12 = arith.constant 9.99999996E-13 : f32
    %22 = vector.broadcast %cst_12 : f32 to vector<8x1xf32>
    %23 = arith.addf %21, %22 : vector<8x1xf32>
    %24 = math.rsqrt %23 : vector<8x1xf32>
    %25 = vector.broadcast %14 : vector<8x1xf32> to vector<8x128xf32>
    %26 = arith.subf %8, %25 : vector<8x128xf32>
    %27 = vector.broadcast %24 : vector<8x1xf32> to vector<8x128xf32>
    %28 = arith.mulf %26, %27 : vector<8x128xf32>
    %29 = vector.broadcast %9 : vector<1x128xf32> to vector<8x128xf32>
    %30 = arith.mulf %28, %29 : vector<8x128xf32>
    %31 = vector.broadcast %10 : vector<1x128xf32> to vector<8x128xf32>
    %32 = arith.addf %30, %31 : vector<8x128xf32>
    %33 = arith.truncf %32 : vector<8x128xf32> to vector<8x128xbf16>
    %c0_13 = arith.constant 0 : index
    %c0_14 = arith.constant 0 : index
    %34 = vector.load %arg6[%c0_13, %c0_14] : memref<8x128xbf16, #tpu.memory_space<vmem>>, vector<8x128xbf16>
    tpu.vector_store %arg6[%c0_13, %c0_14], %33 {strides = array<i32>} : memref<8x128xbf16, #tpu.memory_space<vmem>>, vector<8x128xbf16>,
    return
  }
  func.func @transform_0(%arg0: i32) -> (i32, i32) {
    %c0_i32 = arith.constant 0 : i32
    %c0_i32_0 = arith.constant 0 : i32
    return %arg0, %c0_i32 : i32, i32
  }
  func.func @transform_1(%arg0: i32) -> (i32, i32) {
    %c0_i32 = arith.constant 0 : i32
    %c0_i32_0 = arith.constant 0 : i32
    %c0_i32_1 = arith.constant 0 : i32
    return %c0_i32, %c0_i32_0 : i32, i32
  }
  func.func @transform_2(%arg0: i32) -> (i32, i32) {
    %c0_i32 = arith.constant 0 : i32
    %c0_i32_0 = arith.constant 0 : i32
    %c0_i32_1 = arith.constant 0 : i32
    return %c0_i32, %c0_i32_0 : i32, i32
  }
  func.func @transform_3(%arg0: i32) -> (i32, i32) {
    %c0_i32 = arith.constant 0 : i32
    %c0_i32_0 = arith.constant 0 : i32
    %c0_i32_1 = arith.constant 0 : i32
    return %c0_i32, %c0_i32_0 : i32, i32
  }
  func.func @transform_4(%arg0: i32) -> (i32, i32) {
    %c0_i32 = arith.constant 0 : i32
    %c0_i32_0 = arith.constant 0 : i32
    %c0_i32_1 = arith.constant 0 : i32
    return %c0_i32, %c0_i32_0 : i32, i32
  }
  func.func @transform_5(%arg0: i32) -> (i32, i32) {
    %c0_i32 = arith.constant 0 : i32
    %c0_i32_0 = arith.constant 0 : i32
    return %arg0, %c0_i32 : i32, i32
  }
}

</mosaic_0001>

<llo_original>
// kernel: tpu_custom_call.1
$region0: #{tpu_custom_call.1}
  #allocation0 [shape = 'u32[]', space=smem, size = 0x4, offset = 0x4, fixed_abs, tag = 'smem constant byte address 0x4 - core index']
  #allocation1 [shape = 'u32[72,128]{1,0:T(1,128)}', space=vmem, size = 0x9000, scoped, tag = 'internal scratch']
  %s0 = inlined_call_operand.hbm [shape: bf16[16,128], index: 0, kind: input, shape index: {}]
  %s1 = inlined_call_operand.hbm [shape: bf16[8,128], index: 1, kind: input, shape index: {}]
  %s2 = inlined_call_operand.vmem [shape: bf16[1,128], index: 2, kind: input, shape index: {}]
  %s3 = inlined_call_operand.vmem [shape: f32[1,128], index: 3, kind: input, shape index: {}]
  %s4 = inlined_call_operand.vmem [shape: f32[1,128], index: 4, kind: input, shape index: {}]
  %s5 = inlined_call_operand.hbm [shape: bf16[16,128], index: 5, kind: output, shape index: {}]
  %s6 = sld [smem:[#allocation0]]
  $region61: #{tpu_custom_call.1} parent=0
    _
  %s8 = ssub.s32 1, %s6
  %s9 = scalar_select 0, %s8, %s6
  $region1: #{tpu_custom_call.1} parent=0
    #allocation2 [shape = 'u8[4096]{0}', space=vmem, size = 0x1000, scoped, tag = 'input window, operand 0']
    #allocation3 [shape = 's32[2]{0}', space=sflag, size = 0x8, scoped, tag = 'scoped memory for tpu_custom_call.1']
    #allocation4 [shape = 's32[2]{0}', space=sflag, size = 0x8, scoped, tag = 'scoped memory for tpu_custom_call.1']
    #allocation5 [shape = 'u8[2048]{0}', space=vmem, size = 0x800, scoped, tag = 'input window, operand 1, single buffered']
    #allocation6 [shape = 's32[1]{0}', space=sflag, size = 0x4, scoped, tag = 'scoped memory for tpu_custom_call.1']
    #allocation7 [shape = 'u8[4096]{0}', space=vmem, size = 0x1000, scoped, tag = 'output window, operand 0']
    %10 = vsyncpa [#allocation3], 0
    %s11 = scalar_lea.sflag [#allocation3], 1
    %12 = vsyncpa %s11, 0
    %13 = vsyncpa [#allocation6], 0
    %14 = vsyncpa [#allocation4], 0
    %s15 = scalar_lea.sflag [#allocation4], 1
    %16 = vsyncpa %s15, 0
    loop: start=0, step=1, limit=4
    $region2: #{tpu_custom_call.1} parent=1 // loop_pre_header
      _
    $region3: #{tpu_custom_call.1} parent=1 // loop_header
      %s18 = sphi 0, %s22
      %p19 = scmp.ge.s32.totalorder %s18, 4
      %s28 = sphi 0, %s30
      %s31 = sphi 0, %s28
      %s32 = sphi 0, %s31
      %s48 = sphi 0, %s32
      %s52 = sphi 0, %s52
      %s54 = sphi 0, %s52
      %s55 = sphi 0, %s54
      %s69 = sphi 0, %s55
      %s73 = sphi 0, %s73
      %s75 = sphi 0, %s73
      %s76 = sphi 0, %s75
      %s90 = sphi 0, %s76
      %s94 = sphi 0, %s94
      %s96 = sphi 0, %s94
      %s97 = sphi 0, %s96
      %s111 = sphi 0, %s97
      %s115 = sphi 0, %s115
      %s117 = sphi 0, %s115
      %s118 = sphi 0, %s117
      %s132 = sphi 0, %s118
      %s138 = sphi 0, %s140
      %s141 = sphi 0, %s138
      %s142 = sphi 0, %s141
      %s158 = sphi 0, %s142
    $region4: #{tpu_custom_call.1} parent=1 // loop_header_branch
      %21 = sbr.rel (%p19) target = $region8
    $region5: #{tpu_custom_call.1} parent=1 // loop_body
      %s23 = ssub.s32 %s18, 1
      %s24 = ssub.s32 %s18, 2
      %s25 = sadd.s32 %s18, 1
      %s26 = ssub.s32 %s18, %s25
      %p27 = scmp.eq.s32.totalorder %s26, 0
      %s29 = sadd.s32 %s28, 1
      %s30 = scalar_select %p27, %s28, %s29
      %p33 = pneg %p27
      %p34 = scmp.eq.s32.totalorder %s18, 1
      %p35 = por %p33, %p34
      %p36 = scmp.ne.s32.totalorder %s28, %s31
      %p37 = scmp.eq.s32.totalorder %s18, 0
      %p38 = por %p36, %p37
      %p39 = scmp.ne.s32.totalorder %s28, %s31
      %p40 = scmp.eq.s32.totalorder %s23, 1
      %p41 = por %p39, %p40
      %p42 = scmp.ne.s32.totalorder %s31, %s32
      %p43 = scmp.eq.s32.totalorder %s23, 0
      %p44 = por %p42, %p43
      %p45 = scmp.ne.s32.totalorder %s31, %s32
      %p46 = scmp.eq.s32.totalorder %s24, 1
      %p47 = por %p45, %p46
      %p49 = scmp.ne.s32.totalorder %s32, %s48
      %p50 = scmp.eq.s32.totalorder %s24, 0
      %p51 = por %p49, %p50
      %s53 = sadd.s32 %s52, 1
      %p56 = scmp.eq.s32.totalorder %s18, 1
      %p57 = scmp.ne.s32.totalorder %s52, %s54
      %p58 = scmp.eq.s32.totalorder %s18, 0
      %p59 = por %p57, %p58
      %p60 = scmp.ne.s32.totalorder %s52, %s54
      %p61 = scmp.eq.s32.totalorder %s23, 1
      %p62 = por %p60, %p61
      %p63 = scmp.ne.s32.totalorder %s54, %s55
      %p64 = scmp.eq.s32.totalorder %s23, 0
      %p65 = por %p63, %p64
      %p66 = scmp.ne.s32.totalorder %s54, %s55
      %p67 = scmp.eq.s32.totalorder %s24, 1
      %p68 = por %p66, %p67
      %p70 = scmp.ne.s32.totalorder %s55, %s69
      %p71 = scmp.eq.s32.totalorder %s24, 0
      %p72 = por %p70, %p71
      %s74 = sadd.s32 %s73, 1
      %p77 = scmp.eq.s32.totalorder %s18, 1
      %p78 = scmp.ne.s32.totalorder %s73, %s75
      %p79 = scmp.eq.s32.totalorder %s18, 0
      %p80 = por %p78, %p79
      %p81 = scmp.ne.s32.totalorder %s73, %s75
      %p82 = scmp.eq.s32.totalorder %s23, 1
      %p83 = por %p81, %p82
      %p84 = scmp.ne.s32.totalorder %s75, %s76
      %p85 = scmp.eq.s32.totalorder %s23, 0
      %p86 = por %p84, %p85
      %p87 = scmp.ne.s32.totalorder %s75, %s76
      %p88 = scmp.eq.s32.totalorder %s24, 1
      %p89 = por %p87, %p88
      %p91 = scmp.ne.s32.totalorder %s76, %s90
      %p92 = scmp.eq.s32.totalorder %s24, 0
      %p93 = por %p91, %p92
      %s95 = sadd.s32 %s94, 1
      %p98 = scmp.eq.s32.totalorder %s18, 1
      %p99 = scmp.ne.s32.totalorder %s94, %s96
      %p100 = scmp.eq.s32.totalorder %s18, 0
      %p101 = por %p99, %p100
      %p102 = scmp.ne.s32.totalorder %s94, %s96
      %p103 = scmp.eq.s32.totalorder %s23, 1
      %p104 = por %p102, %p103
      %p105 = scmp.ne.s32.totalorder %s96, %s97
      %p106 = scmp.eq.s32.totalorder %s23, 0
      %p107 = por %p105, %p106
      %p108 = scmp.ne.s32.totalorder %s96, %s97
      %p109 = scmp.eq.s32.totalorder %s24, 1
      %p110 = por %p108, %p109
      %p112 = scmp.ne.s32.totalorder %s97, %s111
      %p113 = scmp.eq.s32.totalorder %s24, 0
      %p114 = por %p112, %p113
      %s116 = sadd.s32 %s115, 1
      %p119 = scmp.eq.s32.totalorder %s18, 1
      %p120 = scmp.ne.s32.totalorder %s115, %s117
      %p121 = scmp.eq.s32.totalorder %s18, 0
      %p122 = por %p120, %p121
      %p123 = scmp.ne.s32.totalorder %s115, %s117
      %p124 = scmp.eq.s32.totalorder %s23, 1
      %p125 = por %p123, %p124
      %p126 = scmp.ne.s32.totalorder %s117, %s118
      %p127 = scmp.eq.s32.totalorder %s23, 0
      %p128 = por %p126, %p127
      %p129 = scmp.ne.s32.totalorder %s117, %s118
      %p130 = scmp.eq.s32.totalorder %s24, 1
      %p131 = por %p129, %p130
      %p133 = scmp.ne.s32.totalorder %s118, %s132
      %p134 = scmp.eq.s32.totalorder %s24, 0
      %p135 = por %p133, %p134
      %s136 = ssub.s32 %s18, %s25
      %p137 = scmp.eq.s32.totalorder %s136, 0
      %s139 = sadd.s32 %s138, 1
      %s140 = scalar_select %p137, %s138, %s139
      %p143 = pneg %p137
      %p144 = scmp.eq.s32.totalorder %s18, 1
      %p145 = por %p143, %p144
      %p146 = scmp.ne.s32.totalorder %s138, %s141
      %p147 = scmp.eq.s32.totalorder %s18, 0
      %p148 = por %p146, %p147
      %p149 = scmp.ne.s32.totalorder %s138, %s141
      %p150 = scmp.eq.s32.totalorder %s23, 1
      %p151 = por %p149, %p150
      %p152 = scmp.ne.s32.totalorder %s141, %s142
      %p153 = scmp.eq.s32.totalorder %s23, 0
      %p154 = por %p152, %p153
      %p155 = scmp.ne.s32.totalorder %s141, %s142
      %p156 = scmp.eq.s32.totalorder %s24, 1
      %p157 = por %p155, %p156
      %p159 = scmp.ne.s32.totalorder %s142, %s158
      %p160 = scmp.eq.s32.totalorder %s24, 0
      %p161 = por %p159, %p160
      %p162 = scmp.le.s32.totalorder 1, %s18
      %p163 = scmp.lt.s32.totalorder %s18, 3
      %p164 = pnand %p162, %p163
      %p165 = pneg %p164
      // Predicated region
      $region9: #{tpu_custom_call.1} parent=5 // pred_check
        _
      $region10: #{tpu_custom_call.1} parent=5 // pred_check_branch
        %167 = sbr.rel (%p164) target = $region12
      $region11: #{tpu_custom_call.1} parent=5 // pred_region
        %s168 = ssub.s32 %s18, 1
        // Predicated region
        $region13: #{tpu_custom_call.1} parent=11 // pred_check
          %p169 = pneg %p65
        $region14: #{tpu_custom_call.1} parent=11 // pred_check_branch
          %171 = sbr.rel (%p169) target = $region16
        $region15: #{tpu_custom_call.1} parent=11 // pred_region
          %173 = vsyncadd [#allocation6], 0
          %s175 = sshll.u32 %s1, 4
          %s176 = int_to_ptr.hbm [resolvable:$true] %s175
          %s177 = sshll.u32 [#allocation5], 4
          %s178 = int_to_ptr.vmem [resolvable:$true] %s177
          %180 = dma.hbm_to_vmem [thread:$0]  %s176, 64, %s178, [#allocation6]
        $region16: #{tpu_custom_call.1} parent=11 // pred_fallthru
          _
        // Predicated region
        $region17: #{tpu_custom_call.1} parent=11 // pred_check
          %p181 = pneg %p86
        $region18: #{tpu_custom_call.1} parent=11 // pred_check_branch
          %183 = sbr.rel (%p181) target = $region20
        $region19: #{tpu_custom_call.1} parent=11 // pred_region
          _
        $region20: #{tpu_custom_call.1} parent=11 // pred_fallthru
          _
        // Predicated region
        $region21: #{tpu_custom_call.1} parent=11 // pred_check
          %p184 = pneg %p107
        $region22: #{tpu_custom_call.1} parent=11 // pred_check_branch
          %186 = sbr.rel (%p184) target = $region24
        $region23: #{tpu_custom_call.1} parent=11 // pred_region
          _
        $region24: #{tpu_custom_call.1} parent=11 // pred_fallthru
          _
        // Predicated region
        $region25: #{tpu_custom_call.1} parent=11 // pred_check
          %p187 = pneg %p128
        $region26: #{tpu_custom_call.1} parent=11 // pred_check_branch
          %189 = sbr.rel (%p187) target = $region28
        $region27: #{tpu_custom_call.1} parent=11 // pred_region
          _
        $region28: #{tpu_custom_call.1} parent=11 // pred_fallthru
          _
      $region12: #{tpu_custom_call.1} parent=5 // pred_fallthru
        _
      %p190 = scmp.lt.s32.totalorder %s18, 2
      // Predicated region
      $region29: #{tpu_custom_call.1} parent=5 // pred_check
        %p191 = pneg %p190
      $region30: #{tpu_custom_call.1} parent=5 // pred_check_branch
        %193 = sbr.rel (%p191) target = $region32
      $region31: #{tpu_custom_call.1} parent=5 // pred_region
        // Predicated region
        $region33: #{tpu_custom_call.1} parent=31 // pred_check
          %p194 = pneg %p38
        $region34: #{tpu_custom_call.1} parent=31 // pred_check_branch
          %196 = sbr.rel (%p194) target = $region36
        $region35: #{tpu_custom_call.1} parent=31 // pred_region
          %s197 = sand.u32 %s28, 1
          %s198 = scalar_lea.sflag [#allocation3], %s197
          %s199 = sand.u32 %s28, 1
          %s200 = smul.addr %s199, 4
          %s201 = scalar_lea.vmem [#allocation2], %s200
          %203 = vsyncadd %s198, 0
          %s204 = smul.addr %s18, 4
          %s205 = scalar_lea.hbm %s0, %s204
          %s207 = sshll.u32 %s205, 4
          %s208 = int_to_ptr.hbm [resolvable:$true] %s207
          %s209 = sshll.u32 %s201, 4
          %s210 = int_to_ptr.vmem [resolvable:$true] %s209
          %212 = dma.hbm_to_vmem [thread:$0]  %s208, 64, %s210, %s198
        $region36: #{tpu_custom_call.1} parent=31 // pred_fallthru
          _
      $region32: #{tpu_custom_call.1} parent=5 // pred_fallthru
        _
      %p213 = scmp.le.s32.totalorder 1, %s18
      %p214 = scmp.lt.s32.totalorder %s18, 3
      %p215 = pnand %p213, %p214
      %p216 = pneg %p215
      // Predicated region
      $region37: #{tpu_custom_call.1} parent=5 // pred_check
        _
      $region38: #{tpu_custom_call.1} parent=5 // pred_check_branch
        %218 = sbr.rel (%p215) target = $region40
      $region39: #{tpu_custom_call.1} parent=5 // pred_region
        %s219 = ssub.s32 %s18, 1
        %s220 = sand.u32 %s31, 1
        %s221 = scalar_lea.sflag [#allocation3], %s220
        %s222 = sand.u32 %s31, 1
        %s223 = smul.addr %s222, 4
        %s224 = scalar_lea.vmem [#allocation2], %s223
        // Predicated region
        $region41: #{tpu_custom_call.1} parent=39 // pred_check
          %p225 = pneg %p44
        $region42: #{tpu_custom_call.1} parent=39 // pred_check_branch
          %227 = sbr.rel (%p225) target = $region44
        $region43: #{tpu_custom_call.1} parent=39 // pred_region
          %229 = dma.done %s221, 64
        $region44: #{tpu_custom_call.1} parent=39 // pred_fallthru
          _
        // Predicated region
        $region45: #{tpu_custom_call.1} parent=39 // pred_check
          %p230 = pneg %p65
        $region46: #{tpu_custom_call.1} parent=39 // pred_check_branch
          %232 = sbr.rel (%p230) target = $region48
        $region47: #{tpu_custom_call.1} parent=39 // pred_region
          %234 = dma.done [#allocation6], 64
        $region48: #{tpu_custom_call.1} parent=39 // pred_fallthru
          _
        %s235 = sand.u32 %s31, 1
        %s236 = scalar_lea.sflag [#allocation3], %s235
        %s237 = sand.u32 %s31, 1
        %s238 = smul.addr %s237, 4
        %s239 = scalar_lea.vmem [#allocation2], %s238
        %p240 = pneg %p44
        %p241 = pneg %p41
        %p242 = pneg %p65
        %p243 = pneg %p62
        %p244 = pneg %p86
        %p245 = pneg %p83
        %p246 = pneg %p107
        %p247 = pneg %p104
        %p248 = pneg %p128
        %p249 = pneg %p125
        %p250 = pneg %p154
        %p251 = pneg %p151
        %s252 = sand.u32 %s141, 1
        %s253 = scalar_lea.sflag [#allocation4], %s252
        %s254 = sand.u32 %s141, 1
        %s255 = smul.addr %s254, 4
        %s256 = scalar_lea.vmem [#allocation7], %s255
        %v257 = vld [vmem:[%s224] sm:$0xf]
        %v258 = vunpack.c.l.bf16 %v257
        %v259 = vld [vmem:[#allocation5] sm:$0xf]
        %v260 = vunpack.c.l.bf16 %v259
        %v261 = vadd.f32 %v258, %v260
        %v262 = vld [vmem:[%s2] sm:$0x1]
        %v263 = vunpack.c.l.bf16 %v262
        %v264 = vperm.slane %v263, 0
        %v265 = vadd.f32 %v261, %v264
        %v266 = vld [vmem:[%s3] sm:$0x1]
        %v267 = vld [vmem:[%s4] sm:$0x1]
        %268 = vadd.xlane.f32.xlu0 %v265
        %v269 = vpop.xlane.xlu0 %268
        %v270 = vrcp.pop 128.0
        %v271 = vmul.f32 128.0, %v270
        %v272 = vsub.f32 1.0, %v271
        %v273 = vmul.f32 %v270, %v272
        %v274 = vadd.f32 %v270, %v273
        %vm275 = vweird.f32 %v270
        %v276 = vsel %vm275, %v270, %v274
        %v277 = vmul.f32 %v269, %v276
        %v278 = vsub.f32 %v265, %v277
        %v279 = vmul.f32 %v278, %v278
        %280 = vadd.xlane.f32.xlu0 %v279
        %v281 = vpop.xlane.xlu0 %280
        %v282 = vmul.f32 %v281, %v276
        %v283 = vadd.f32 %v282, 1e-12
        %v284 = vrsqrt.pop %v283
        %v285 = vmul.f32 %v284, %v283
        %v286 = vmul.f32 %v285, %v284
        %v287 = vmul.f32 0.5, %v286
        %v288 = vsub.f32 1.5, %v287
        %v289 = vmul.f32 %v284, %v288
        %vm290 = vweird.f32 %v283
        %vm291 = vweird.f32 %v284
        %vm292 = vmor %vm290, %vm291
        %v293 = vsel %vm292, %v284, %v289
        %v294 = vmul.f32 %v278, %v293
        %v296 = vperm.slane %v266, 0
        %v298 = vmul.f32 %v294, %v296
        %v300 = vperm.slane %v267, 0
        %v302 = vadd.f32 %v298, %v300
        %v303 = vpack.c.bf16 %v302, %v302
        %304 = vst [vmem:[%s256] sm:$0xf] %v303
        %s305 = sand.u32 %s141, 1
        %s306 = scalar_lea.sflag [#allocation4], %s305
        %s307 = sand.u32 %s141, 1
        %s308 = smul.addr %s307, 4
        %s309 = scalar_lea.vmem [#allocation7], %s308
        // Predicated region
        $region49: #{tpu_custom_call.1} parent=39 // pred_check
          %p310 = pneg %p151
        $region50: #{tpu_custom_call.1} parent=39 // pred_check_branch
          %312 = sbr.rel (%p310) target = $region52
        $region51: #{tpu_custom_call.1} parent=39 // pred_region
          %314 = vsyncadd %s306, 0
          %s315 = smul.addr %s23, 4
          %s316 = scalar_lea.hbm %s5, %s315
          %s318 = sshll.u32 %s309, 4
          %s319 = int_to_ptr.vmem [resolvable:$true] %s318
          %s320 = sshll.u32 %s316, 4
          %s321 = int_to_ptr.hbm [resolvable:$true] %s320
          %323 = dma.vmem_to_hbm [thread:$0]  %s319, 64, %s321, %s306
        $region52: #{tpu_custom_call.1} parent=39 // pred_fallthru
          _
      $region40: #{tpu_custom_call.1} parent=5 // pred_fallthru
        _
      %p324 = scmp.le.s32.totalorder 2, %s18
      // Predicated region
      $region53: #{tpu_custom_call.1} parent=5 // pred_check
        %p325 = pneg %p324
      $region54: #{tpu_custom_call.1} parent=5 // pred_check_branch
        %327 = sbr.rel (%p325) target = $region56
      $region55: #{tpu_custom_call.1} parent=5 // pred_region
        %s328 = ssub.s32 %s18, 2
        // Predicated region
        $region57: #{tpu_custom_call.1} parent=55 // pred_check
          %p329 = pneg %p157
        $region58: #{tpu_custom_call.1} parent=55 // pred_check_branch
          %331 = sbr.rel (%p329) target = $region60
        $region59: #{tpu_custom_call.1} parent=55 // pred_region
          %s332 = sand.u32 %s142, 1
          %s333 = scalar_lea.sflag [#allocation4], %s332
          %s334 = sand.u32 %s142, 1
          %s335 = smul.addr %s334, 4
          %s336 = scalar_lea.vmem [#allocation7], %s335
          %338 = dma.done %s333, 64
        $region60: #{tpu_custom_call.1} parent=55 // pred_fallthru
          _
      $region56: #{tpu_custom_call.1} parent=5 // pred_fallthru
        _
    $region6: #{tpu_custom_call.1} parent=1 // loop_footer
      %s22 = sadd.s32 1, %s18
    $region7: #{tpu_custom_call.1} parent=1 // loop_footer_branch
      %17 = sbr.rel target = $region3
    $region8: #{tpu_custom_call.1} parent=1 // loop_exit
      _
    %339 = vsyncpa [#allocation3], 1
    %s340 = scalar_lea.sflag [#allocation3], 1
    %341 = vsyncpa %s340, 1
    %342 = vsyncpa [#allocation6], 1
    %343 = vsyncpa [#allocation4], 1
    %s344 = scalar_lea.sflag [#allocation4], 1
    %345 = vsyncpa %s344, 1

</llo_original>
